<compile_context>
chip_gen: v6e
topology: v6e:2x2x1
jax: 0.10.0
libtpu: 0.0.40
codegen_flags: <defaults>
</compile_context>

<pallas_src>
import jax
import jax.numpy as jnp
from jax.experimental import pallas as pl
from jax.experimental.pallas import tpu as pltpu


def _mlp_kernel(x_ref, wu_ref, bu_ref, wd_ref, bd_ref, o_ref, acc_ref):
    j = pl.program_id(1)

    @pl.when(j == 0)
    def _init():
        acc_ref[...] = jnp.zeros_like(acc_ref)

    # Up-projection chunk: bf16 on the MXU, f32 accumulation.
    x_bf16 = x_ref[...].astype(jnp.bfloat16)                      # (tm, H)
    h = jnp.dot(x_bf16, wu_ref[...], preferred_element_type=jnp.float32)
    h = h + bu_ref[...]                                           # (tm, tn) f32
    # SiLU in f32: sigmoid lands on the EUP slot and hides under MXU work.
    h = h * jax.nn.sigmoid(h)
    # Down-projection chunk: accumulate partial sums over the 4H axis.
    acc_ref[...] += jnp.dot(h.astype(jnp.bfloat16), wd_ref[...],
                            preferred_element_type=jnp.float32)

    @pl.when(j == pl.num_programs(1) - 1)
    def _finalize():
        y = acc_ref[...] + bd_ref[...] + x_ref[...].astype(jnp.float32)
        o_ref[...] = y.astype(o_ref.dtype)


def _round_up(x, m):
    return (x + m - 1) // m * m


def universal_mlp(x, w_up, b_up, w_down, b_down, *, tm=256, tn=1024):
    """x: (M, H); w_up: (H, 4H); b_up: (4H,); w_down: (4H, H); b_down: (H,)."""
    M, H = x.shape
    H4 = w_up.shape[1]

    # Token-row tile: multiple of 8 sublanes, clamped so tiny inputs don't over-pad.
    tm = min(tm, _round_up(M, 8))
    Mp = _round_up(M, tm)

    # Intermediate-dim chunk: must divide 4H (real hidden sizes are 128-aligned).
    tn = min(tn, H4)
    while H4 % tn:
        tn //= 2

    # Ragged M: pad rows up to a tile multiple, slice off at the end.
    x_p = x if Mp == M else jnp.pad(x, ((0, Mp - M), (0, 0)))

    # Weights in bf16 -> native MXU rate, half the weight VMEM/HBM traffic.
    wu = w_up.astype(jnp.bfloat16)
    wd = w_down.astype(jnp.bfloat16)
    bu2 = b_up.reshape(1, H4).astype(jnp.float32)
    bd2 = b_down.reshape(1, H).astype(jnp.float32)

    grid = (Mp // tm, H4 // tn)

    cost = pl.CostEstimate(
        flops=2 * Mp * H * H4 * 2,                 # two matmuls
        transcendentals=Mp * H4,                   # sigmoid
        bytes_accessed=(x_p.size * x_p.dtype.itemsize
                        + wu.size * wu.dtype.itemsize
                        + wd.size * wd.dtype.itemsize
                        + bu2.size * 4 + bd2.size * 4
                        + Mp * H * x.dtype.itemsize),
    )

    out_p = pl.pallas_call(
        _mlp_kernel,
        out_shape=jax.ShapeDtypeStruct((Mp, H), x.dtype),
        grid_spec=pltpu.PrefetchScalarGridSpec(
            num_scalar_prefetch=0,
            grid=grid,
            in_specs=[
                pl.BlockSpec((tm, H), lambda i, j: (i, 0)),   # x rows (resident over j)
                pl.BlockSpec((H, tn), lambda i, j: (0, j)),   # w_up chunk (streams)
                pl.BlockSpec((1, tn), lambda i, j: (0, j)),   # b_up chunk
                pl.BlockSpec((tn, H), lambda i, j: (j, 0)),   # w_down chunk (streams)
                pl.BlockSpec((1, H), lambda i, j: (0, 0)),    # b_down
            ],
            out_specs=pl.BlockSpec((tm, H), lambda i, j: (i, 0)),
            scratch_shapes=[pltpu.VMEM((tm, H), jnp.float32)],   # f32 accumulator
        ),
        compiler_params=pltpu.CompilerParams(
            dimension_semantics=("parallel", "arbitrary"),
            vmem_limit_bytes=64 * 1024 * 1024,
        ),
        cost_estimate=cost,
    )(x_p, wu, bu2, wd, bd2)

    return out_p[:M] if Mp != M else out_p


def reference_mlp_f32(x, w_up, b_up, w_down, b_down):
    h = x @ w_up + b_up
    h = h * jax.nn.sigmoid(h)
    return h @ w_down + b_down + x


def reference_mlp_bf16(x, w_up, b_up, w_down, b_down):
    # Same bf16-matmul / f32-accumulate recipe as the kernel.
    h = jnp.dot(x.astype(jnp.bfloat16), w_up.astype(jnp.bfloat16),
                preferred_element_type=jnp.float32) + b_up
    h = h * jax.nn.sigmoid(h)
    y = jnp.dot(h.astype(jnp.bfloat16), w_down.astype(jnp.bfloat16),
                preferred_element_type=jnp.float32) + b_down
    return y + x


if __name__ == "__main__":
    batch, seq, hidden = 2, 8, 32
    inter = hidden * 4

    key = jax.random.PRNGKey(0)
    kx, k1, k2, k3, k4 = jax.random.split(key, 5)

    x = jax.random.normal(kx, (batch, seq, hidden), dtype=jnp.float32)
    bound_up = 1.0 / (hidden ** 0.5)
    bound_dn = 1.0 / (inter ** 0.5)
    # PyTorch weight shapes: up (4H, H), down (H, 4H); stored transposed here.
    w_up = jax.random.uniform(k1, (hidden, inter), jnp.float32, -bound_up, bound_up)
    b_up = jax.random.uniform(k2, (inter,), jnp.float32, -bound_up, bound_up)
    w_down = jax.random.uniform(k3, (inter, hidden), jnp.float32, -bound_dn, bound_dn)
    b_down = jax.random.uniform(k4, (hidden,), jnp.float32, -bound_dn, bound_dn)

    x2d = x.reshape(batch * seq, hidden)
    out2d = universal_mlp(x2d, w_up, b_up, w_down, b_down)
    out = out2d.reshape(batch, seq, hidden)
    jax.block_until_ready(out)

    # Tight check vs a reference using the same bf16-matmul recipe,
    # loose check vs the pure-f32 PyTorch-equivalent math.
    ref_bf16 = reference_mlp_bf16(x2d, w_up, b_up, w_down, b_down).reshape(batch, seq, hidden)
    ref_f32 = reference_mlp_f32(x2d, w_up, b_up, w_down, b_down).reshape(batch, seq, hidden)
    assert jnp.allclose(out, ref_bf16, atol=1e-3, rtol=1e-3), "mismatch vs bf16 reference"
    assert jnp.allclose(out, ref_f32, atol=5e-2, rtol=5e-2), "mismatch vs f32 reference"

    # NOTE: the toy H=32 output forces masked partial stores; real hidden sizes
    # (multiples of 128) give lane-dense unmasked writebacks.
    print("KERNEL_OK")
</pallas_src>

<mosaic_0001>
module attributes {stable_mosaic.version = 11 : i64} {
  func.func @_mlp_kernel(%arg0: i32, %arg1: i32, %arg2: memref<16x32xf32, #tpu.memory_space<vmem>>, %arg3: memref<32x128xbf16, #tpu.memory_space<vmem>>, %arg4: memref<1x128xf32, #tpu.memory_space<vmem>>, %arg5: memref<128x32xbf16, #tpu.memory_space<vmem>>, %arg6: memref<1x32xf32, #tpu.memory_space<vmem>>, %arg7: memref<16x32xf32, #tpu.memory_space<vmem>>, %arg8: memref<16x32xf32, #tpu.memory_space<vmem>>) attributes {dimension_semantics = [#tpu.dimension_semantics<parallel>, #tpu.dimension_semantics<arbitrary>], iteration_bounds = array<i64: 1, 1>, scalar_prefetch = 0 : i64, scratch_operands = 1 : i64, tpu.core_type = #tpu.core_type<tc>, window_params = [{transform_indices = @transform_0, window_bounds = array<i64: 16, 32>}, {transform_indices = @transform_1, window_bounds = array<i64: 32, 128>}, {transform_indices = @transform_2, window_bounds = array<i64: 1, 128>}, {transform_indices = @transform_3, window_bounds = array<i64: 128, 32>}, {pipeline_mode = #tpu.pipeline_mode<synchronous>, transform_indices = @transform_4, window_bounds = array<i64: 1, 32>}, {transform_indices = @transform_5, window_bounds = array<i64: 16, 32>}]} {
    %c0_i32 = arith.constant 0 : i32
    %0 = arith.cmpi eq, %arg1, %c0_i32 : i32
    %1 = arith.extui %0 : i1 to i32
    %c0_i32_0 = arith.constant 0 : i32
    %2 = arith.cmpi ne, %1, %c0_i32_0 : i32
    scf.if %2 {
      %cst_16 = arith.constant 0.000000e+00 : f32
      %25 = vector.broadcast %cst_16 : f32 to vector<16x32xf32>
      %c0_17 = arith.constant 0 : index
      %c0_18 = arith.constant 0 : index
      %26 = vector.load %arg8[%c0_17, %c0_18] : memref<16x32xf32, #tpu.memory_space<vmem>>, vector<16x32xf32>
      tpu.vector_store %arg8[%c0_17, %c0_18], %25 {strides = array<i32>} : memref<16x32xf32, #tpu.memory_space<vmem>>, vector<16x32xf32>,
    } else {
    }
    %c0 = arith.constant 0 : index
    %c0_1 = arith.constant 0 : index
    %3 = vector.load %arg2[%c0, %c0_1] : memref<16x32xf32, #tpu.memory_space<vmem>>, vector<16x32xf32>
    %4 = arith.truncf %3 : vector<16x32xf32> to vector<16x32xbf16>
    %c0_2 = arith.constant 0 : index
    %c0_3 = arith.constant 0 : index
    %5 = vector.load %arg3[%c0_2, %c0_3] : memref<32x128xbf16, #tpu.memory_space<vmem>>, vector<32x128xbf16>
    %cst = arith.constant dense<0.000000e+00> : vector<16x128xf32>
    %6 = tpu.matmul %4, %5, %cst {dimension_numbers = #tpu.dot_dimension_numbers<[1], [0], [0], [1], [0, 0, 1, 1], [], []>} : vector<16x32xbf16>, vector<32x128xbf16>, vector<16x128xf32> -> vector<16x128xf32>
    %c0_4 = arith.constant 0 : index
    %c0_5 = arith.constant 0 : index
    %7 = vector.load %arg4[%c0_4, %c0_5] : memref<1x128xf32, #tpu.memory_space<vmem>>, vector<1x128xf32>
    %8 = vector.broadcast %7 : vector<1x128xf32> to vector<16x128xf32>
    %9 = arith.addf %6, %8 : vector<16x128xf32>
    %10 = arith.negf %9 : vector<16x128xf32>
    %11 = math.exp %10 : vector<16x128xf32>
    %cst_6 = arith.constant 1.000000e+00 : f32
    %12 = vector.broadcast %cst_6 : f32 to vector<16x128xf32>
    %13 = arith.addf %12, %11 : vector<16x128xf32>
    %14 = arith.divf %12, %13 : vector<16x128xf32>
    %15 = arith.mulf %9, %14 : vector<16x128xf32>
    %c0_7 = arith.constant 0 : index
    %c0_8 = arith.constant 0 : index
    %16 = vector.load %arg8[%c0_7, %c0_8] : memref<16x32xf32, #tpu.memory_space<vmem>>, vector<16x32xf32>
    %17 = arith.truncf %15 : vector<16x128xf32> to vector<16x128xbf16>
    %c0_9 = arith.constant 0 : index
    %c0_10 = arith.constant 0 : index
    %18 = vector.load %arg5[%c0_9, %c0_10] : memref<128x32xbf16, #tpu.memory_space<vmem>>, vector<128x32xbf16>
    %cst_11 = arith.constant dense<0.000000e+00> : vector<16x32xf32>
    %19 = tpu.matmul %17, %18, %cst_11 {dimension_numbers = #tpu.dot_dimension_numbers<[1], [0], [0], [1], [0, 0, 1, 1], [], []>} : vector<16x128xbf16>, vector<128x32xbf16>, vector<16x32xf32> -> vector<16x32xf32>
    %20 = arith.addf %16, %19 : vector<16x32xf32>
    %c0_12 = arith.constant 0 : index
    %c0_13 = arith.constant 0 : index
    %21 = vector.load %arg8[%c0_12, %c0_13] : memref<16x32xf32, #tpu.memory_space<vmem>>, vector<16x32xf32>
    tpu.vector_store %arg8[%c0_12, %c0_13], %20 {strides = array<i32>} : memref<16x32xf32, #tpu.memory_space<vmem>>, vector<16x32xf32>,
    %c0_i32_14 = arith.constant 0 : i32
    %22 = arith.cmpi eq, %arg1, %c0_i32_14 : i32
    %23 = arith.extui %22 : i1 to i32
    %c0_i32_15 = arith.constant 0 : i32
    %24 = arith.cmpi ne, %23, %c0_i32_15 : i32
    scf.if %24 {
      %c0_16 = arith.constant 0 : index
      %c0_17 = arith.constant 0 : index
      %25 = vector.load %arg8[%c0_16, %c0_17] : memref<16x32xf32, #tpu.memory_space<vmem>>, vector<16x32xf32>
      %c0_18 = arith.constant 0 : index
      %c0_19 = arith.constant 0 : index
      %26 = vector.load %arg6[%c0_18, %c0_19] : memref<1x32xf32, #tpu.memory_space<vmem>>, vector<1x32xf32>
      %27 = vector.broadcast %26 : vector<1x32xf32> to vector<16x32xf32>
      %28 = arith.addf %25, %27 : vector<16x32xf32>
      %c0_20 = arith.constant 0 : index
      %c0_21 = arith.constant 0 : index
      %29 = vector.load %arg2[%c0_20, %c0_21] : memref<16x32xf32, #tpu.memory_space<vmem>>, vector<16x32xf32>
      %30 = arith.addf %28, %29 : vector<16x32xf32>
      %c0_22 = arith.constant 0 : index
      %c0_23 = arith.constant 0 : index
      %31 = vector.load %arg7[%c0_22, %c0_23] : memref<16x32xf32, #tpu.memory_space<vmem>>, vector<16x32xf32>
      tpu.vector_store %arg7[%c0_22, %c0_23], %30 {strides = array<i32>} : memref<16x32xf32, #tpu.memory_space<vmem>>, vector<16x32xf32>,
    } else {
    }
    return
  }
  func.func @transform_0(%arg0: i32, %arg1: i32) -> (i32, i32) {
    %c0_i32 = arith.constant 0 : i32
    %c0_i32_0 = arith.constant 0 : i32
    return %arg0, %c0_i32 : i32, i32
  }
  func.func @transform_1(%arg0: i32, %arg1: i32) -> (i32, i32) {
    %c0_i32 = arith.constant 0 : i32
    %c0_i32_0 = arith.constant 0 : i32
    return %c0_i32, %arg1 : i32, i32
  }
  func.func @transform_2(%arg0: i32, %arg1: i32) -> (i32, i32) {
    %c0_i32 = arith.constant 0 : i32
    %c0_i32_0 = arith.constant 0 : i32
    return %c0_i32, %arg1 : i32, i32
  }
  func.func @transform_3(%arg0: i32, %arg1: i32) -> (i32, i32) {
    %c0_i32 = arith.constant 0 : i32
    %c0_i32_0 = arith.constant 0 : i32
    return %arg1, %c0_i32 : i32, i32
  }
  func.func @transform_4(%arg0: i32, %arg1: i32) -> (i32, i32) {
    %c0_i32 = arith.constant 0 : i32
    %c0_i32_0 = arith.constant 0 : i32
    %c0_i32_1 = arith.constant 0 : i32
    return %c0_i32, %c0_i32_0 : i32, i32
  }
  func.func @transform_5(%arg0: i32, %arg1: i32) -> (i32, i32) {
    %c0_i32 = arith.constant 0 : i32
    %c0_i32_0 = arith.constant 0 : i32
    return %arg0, %c0_i32 : i32, i32
  }
}

</mosaic_0001>

<llo_original>
// kernel: tpu_custom_call.1
$region0: #{tpu_custom_call.1}
  #allocation0 [shape = 'u32[]', space=smem, size = 0x4, offset = 0x4, fixed_abs, tag = 'smem constant byte address 0x4 - core index']
  #allocation1 [shape = 'u32[144,128]{1,0:T(1,128)}', space=vmem, size = 0x12000, scoped, tag = 'internal scratch']
  #allocation2 [shape = 'f32[16,32]{1,0:T(8,128)}', space=vmem, size = 0x2000, scoped, tag = 'scratch operand']
  %s0 = inlined_call_operand.vmem [shape: f32[16,32], index: 0, kind: input, shape index: {}]
  %s1 = inlined_call_operand.vmem [shape: bf16[32,128], index: 1, kind: input, shape index: {}]
  %s2 = inlined_call_operand.vmem [shape: f32[1,128], index: 2, kind: input, shape index: {}]
  %s3 = inlined_call_operand.vmem [shape: bf16[128,32], index: 3, kind: input, shape index: {}]
  %s4 = inlined_call_operand.vmem [shape: f32[1,32], index: 4, kind: input, shape index: {}]
  %s5 = inlined_call_operand.hbm [shape: f32[16,32], index: 5, kind: output, shape index: {}]
  %s6 = sld [smem:[#allocation0]]
  $region38: #{tpu_custom_call.1} parent=0
    _
  %s8 = ssub.s32 1, %s6
  %s9 = scalar_select 0, %s8, %s6
  $region1: #{tpu_custom_call.1} parent=0
    #allocation3 [shape = 'u8[8192]{0}', space=vmem, size = 0x2000, scoped, tag = 'output window, operand 0, single buffered']
    #allocation4 [shape = 's32[1]{0}', space=sflag, size = 0x4, scoped, tag = 'scoped memory for tpu_custom_call.1']
    %10 = vsyncpa [#allocation4], 0
    // Predicated region
    $region2: #{tpu_custom_call.1} parent=1 // pred_check
      _
    $region3: #{tpu_custom_call.1} parent=1 // pred_check_branch
      %12 = sbr.rel (0) target = $region5
    $region4: #{tpu_custom_call.1} parent=1 // pred_region
      _
    $region5: #{tpu_custom_call.1} parent=1 // pred_fallthru
      _
    // Predicated region
    $region6: #{tpu_custom_call.1} parent=1 // pred_check
      _
    $region7: #{tpu_custom_call.1} parent=1 // pred_check_branch
      %14 = sbr.rel (0) target = $region9
    $region8: #{tpu_custom_call.1} parent=1 // pred_region
      _
    $region9: #{tpu_custom_call.1} parent=1 // pred_fallthru
      _
    // Predicated region
    $region10: #{tpu_custom_call.1} parent=1 // pred_check
      _
    $region11: #{tpu_custom_call.1} parent=1 // pred_check_branch
      %16 = sbr.rel (0) target = $region13
    $region12: #{tpu_custom_call.1} parent=1 // pred_region
      _
    $region13: #{tpu_custom_call.1} parent=1 // pred_fallthru
      _
    // Predicated region
    $region14: #{tpu_custom_call.1} parent=1 // pred_check
      _
    $region15: #{tpu_custom_call.1} parent=1 // pred_check_branch
      %18 = sbr.rel (0) target = $region17
    $region16: #{tpu_custom_call.1} parent=1 // pred_region
      _
    $region17: #{tpu_custom_call.1} parent=1 // pred_fallthru
      _
    // Predicated region
    $region18: #{tpu_custom_call.1} parent=1 // pred_check
      _
    $region19: #{tpu_custom_call.1} parent=1 // pred_check_branch
      %20 = sbr.rel (0) target = $region21
    $region20: #{tpu_custom_call.1} parent=1 // pred_region
      _
    $region21: #{tpu_custom_call.1} parent=1 // pred_fallthru
      _
    %p22 = scmp.eq.s32.totalorder 0, 0
    // Predicated region
    $region22: #{tpu_custom_call.1} parent=1 // pred_check
      %p23 = pneg %p22
    $region23: #{tpu_custom_call.1} parent=1 // pred_check_branch
      %25 = sbr.rel (%p23) target = $region25
    $region24: #{tpu_custom_call.1} parent=1 // pred_region
      %vm26 = vcmask 261120
      %27 = vst.msk [vmem:[#allocation2] sm:$0xff] %vm26, 0.0
      %28 = vst.msk [vmem:[#allocation2 + $0x8] sm:$0xff] %vm26, 0.0
    $region25: #{tpu_custom_call.1} parent=1 // pred_fallthru
      _
    %v29 = vld [vmem:[%s0] sm:$0xff]
    %v30 = vld [vmem:[%s0 + $0x8] sm:$0xff]
    %v31 = vpack.c.bf16 %v30, %v29
    %v32 = vld [vmem:[%s1] sm:$0xf]
    %v33 = vld [vmem:[%s1 + $0x4] sm:$0xf]
    %v34 = vld [vmem:[%s1 + $0x8] sm:$0xf]
    %v35 = vld [vmem:[%s1 + $0xc] sm:$0xf]
    %v36 = vld [vmem:[%s2] sm:$0x1]
    %v38 = vlaneseq
    %v39 = vshrl.u32 %v38, 7
    %v40 = vsub.s32 0, %v39
    %v41 = vrot.slane %v36, %v40
    %v47 = vunpack.c.l.b16 %v32
    %v48 = vunpack.c.l.b16 %v33
    %v49 = vunpack.c.l.b16 %v34
    %v50 = vunpack.c.l.b16 %v35
    %v51 = vpack.c.b16 %v48, %v47
    %v52 = vpack.c.b16 %v50, %v49
    %vm55 = vcmask 261120
    %v57 = vsel %vm55, %v31, 0
    %59 = vmatprep.subr.bf16.mxu0 0
    %60 = vmatpush1.bf16.msra.mxu0 0
    %61 = vmatprep.subr.bf16.mxu0 0
    %62 = vmatpush1.bf16.msra.mxu0 0
    %63 = vmatprep.subr.bf16.mxu0 0
    %64 = vmatpush1.bf16.msra.mxu0 0
    %65 = vmatprep.subr.bf16.mxu0 0
    %66 = vmatpush1.bf16.msra.mxu0 0
    %67 = vmatprep.subr.bf16.mxu0 0
    %68 = vmatpush1.bf16.msra.mxu0 0
    %69 = vmatprep.subr.bf16.mxu0 0
    %70 = vmatpush1.bf16.msra.mxu0 0
    %71 = vmatprep.subr.bf16.mxu0 0
    %72 = vmatpush1.bf16.msra.mxu0 %v52
    %73 = vmatprep.subr.bf16.mxu0 0
    %74 = vmatpush1.bf16.msra.mxu0 %v51
    %75 = vmatprep.subr.bf16.mxu0 0
    %76 = vmatpush2.bf16.msra.mxu0 0
    %77 = vmatprep.subr.bf16.mxu0 0
    %78 = vmatpush2.bf16.msra.mxu0 0
    %79 = vmatprep.subr.bf16.mxu0 0
    %80 = vmatpush2.bf16.msra.mxu0 0
    %81 = vmatprep.subr.bf16.mxu0 0
    %82 = vmatpush2.bf16.msra.mxu0 0
    %83 = vmatprep.subr.bf16.mxu0 0
    %84 = vmatpush2.bf16.msra.mxu0 0
    %85 = vmatprep.subr.bf16.mxu0 0
    %86 = vmatpush2.bf16.msra.mxu0 0
    %87 = vmatprep.subr.bf16.mxu0 0
    %88 = vmatpush2.bf16.msra.mxu0 0
    %89 = vmatprep.subr.bf16.mxu0 0
    %90 = vmatpush2.bf16.msra.mxu0 0
    %91 = vmatprep.mubr.bf16.mxu0 0
    %92 = vmatmul.mubr.bf16.gmra.mxu0 %v57
    %v93 = vpop.f32.mrf.mxu0
    %v94 = vadd.f32 %v41, %v93
    %v95 = vpop.f32.mrf.mxu0
    %v96 = vpop.f32.mrf.mxu0
    %v97 = vadd.f32 %v41, %v96
    %v98 = vpop.f32.mrf.mxu0
    %99 = vdwg.mxu0
    %v100 = vxor.u32 %v94, 2147483648
    %v101 = vxor.u32 %v97, 2147483648
    %v102 = vmul.f32 %v100, 1.442695
    %v103 = vpow.pop %v102
    %v104 = vmul.f32 %v101, 1.442695
    %v105 = vpow.pop %v104
    %v106 = vadd.f32 %v103, 1.0
    %v107 = vadd.f32 %v105, 1.0
    %v108 = vrcp.pop %v106
    %v109 = vmul.f32 1.0, %v108
    %v110 = vrcp.pop %v107
    %v111 = vmul.f32 1.0, %v110
    %v112 = vmul.f32 %v94, %v109
    %v113 = vmul.f32 %v97, %v111
    %v114 = vld [vmem:[#allocation2] sm:$0xff]
    %v115 = vld [vmem:[#allocation2 + $0x8] sm:$0xff]
    %v116 = vpack.c.bf16 %v113, %v112
    %v117 = vld [vmem:[%s3] sm:$0xf]
    %v118 = vld [vmem:[%s3 + $0x4] sm:$0xf]
    %v119 = vld [vmem:[%s3 + $0x8] sm:$0xf]
    %v120 = vld [vmem:[%s3 + $0xc] sm:$0xf]
    %v121 = vld [vmem:[%s3 + $0x10] sm:$0xf]
    %v122 = vld [vmem:[%s3 + $0x14] sm:$0xf]
    %v123 = vld [vmem:[%s3 + $0x18] sm:$0xf]
    %v124 = vld [vmem:[%s3 + $0x1c] sm:$0xf]
    %v125 = vld [vmem:[%s3 + $0x20] sm:$0xf]
    %v126 = vld [vmem:[%s3 + $0x24] sm:$0xf]
    %v127 = vld [vmem:[%s3 + $0x28] sm:$0xf]
    %v128 = vld [vmem:[%s3 + $0x2c] sm:$0xf]
    %v129 = vld [vmem:[%s3 + $0x30] sm:$0xf]
    %v130 = vld [vmem:[%s3 + $0x34] sm:$0xf]
    %v131 = vld [vmem:[%s3 + $0x38] sm:$0xf]
    %v132 = vld [vmem:[%s3 + $0x3c] sm:$0xf]
    %v149 = vunpack.c.l.b16 %v117
    %v150 = vunpack.c.l.b16 %v118
    %v151 = vunpack.c.l.b16 %v119
    %v152 = vunpack.c.l.b16 %v120
    %v153 = vunpack.c.l.b16 %v121
    %v154 = vunpack.c.l.b16 %v122
    %v155 = vunpack.c.l.b16 %v123
    %v156 = vunpack.c.l.b16 %v124
    %v157 = vunpack.c.l.b16 %v125
    %v158 = vunpack.c.l.b16 %v126
    %v159 = vunpack.c.l.b16 %v127
    %v160 = vunpack.c.l.b16 %v128
    %v161 = vunpack.c.l.b16 %v129
    %v162 = vunpack.c.l.b16 %v130
    %v163 = vunpack.c.l.b16 %v131
    %v164 = vunpack.c.l.b16 %v132
    %v165 = vpack.c.b16 %v150, %v149
    %v166 = vpack.c.b16 %v152, %v151
    %v167 = vpack.c.b16 %v154, %v153
    %v168 = vpack.c.b16 %v156, %v155
    %v169 = vpack.c.b16 %v158, %v157
    %v170 = vpack.c.b16 %v160, %v159
    %v171 = vpack.c.b16 %v162, %v161
    %v172 = vpack.c.b16 %v164, %v163
    %181 = vmatprep.subr.bf16.mxu0 0
    %182 = vmatpush1.bf16.msra.mxu0 %v172
    %183 = vmatprep.subr.bf16.mxu0 0
    %184 = vmatpush1.bf16.msra.mxu0 %v171
    %185 = vmatprep.subr.bf16.mxu0 0
    %186 = vmatpush1.bf16.msra.mxu0 %v170
    %187 = vmatprep.subr.bf16.mxu0 0
    %188 = vmatpush1.bf16.msra.mxu0 %v169
    %189 = vmatprep.subr.bf16.mxu0 0
    %190 = vmatpush1.bf16.msra.mxu0 %v168
    %191 = vmatprep.subr.bf16.mxu0 0
    %192 = vmatpush1.bf16.msra.mxu0 %v167
    %193 = vmatprep.subr.bf16.mxu0 0
    %194 = vmatpush1.bf16.msra.mxu0 %v166
    %195 = vmatprep.subr.bf16.mxu0 0
    %196 = vmatpush1.bf16.msra.mxu0 %v165
    %197 = vmatprep.subr.bf16.mxu0 0
    %198 = vmatpush2.bf16.msra.mxu0 0
    %199 = vmatprep.subr.bf16.mxu0 0
    %200 = vmatpush2.bf16.msra.mxu0 0
    %201 = vmatprep.subr.bf16.mxu0 0
    %202 = vmatpush2.bf16.msra.mxu0 0
    %203 = vmatprep.subr.bf16.mxu0 0
    %204 = vmatpush2.bf16.msra.mxu0 0
    %205 = vmatprep.subr.bf16.mxu0 0
    %206 = vmatpush2.bf16.msra.mxu0 0
    %207 = vmatprep.subr.bf16.mxu0 0
    %208 = vmatpush2.bf16.msra.mxu0 0
    %209 = vmatprep.subr.bf16.mxu0 0
    %210 = vmatpush2.bf16.msra.mxu0 0
    %211 = vmatprep.subr.bf16.mxu0 0
    %212 = vmatpush2.bf16.msra.mxu0 0
    %213 = vmatprep.mubr.bf16.mxu0 0
    %214 = vmatmul.mubr.bf16.gmra.mxu0 %v116
    %v215 = vpop.f32.mrf.mxu0
    %v216 = vadd.f32 0.0, %v215
    %v217 = vpop.f32.mrf.mxu0
    %v218 = vpop.f32.mrf.mxu0
    %v219 = vadd.f32 0.0, %v218
    %v220 = vpop.f32.mrf.mxu0
    %221 = vdwg.mxu0
    %v222 = vadd.f32 %v114, %v216
    %v223 = vadd.f32 %v115, %v219
    %224 = vst.msk [vmem:[#allocation2] sm:$0xff] %vm55, %v222
    %225 = vst.msk [vmem:[#allocation2 + $0x8] sm:$0xff] %vm55, %v223
    // Predicated region
    $region26: #{tpu_custom_call.1} parent=1 // pred_check
      %p226 = pneg %p22
    $region27: #{tpu_custom_call.1} parent=1 // pred_check_branch
      %228 = sbr.rel (%p226) target = $region29
    $region28: #{tpu_custom_call.1} parent=1 // pred_region
      %v229 = vld [vmem:[#allocation2] sm:$0xff]
      %v230 = vld [vmem:[#allocation2 + $0x8] sm:$0xff]
      %v231 = vld [vmem:[%s4] sm:$0x1]
      %v233 = vlaneseq
      %v234 = vshrl.u32 %v233, 7
      %v235 = vsub.s32 0, %v234
      %v236 = vrot.slane %v231, %v235
      %v238 = vadd.f32 %v229, %v236
      %v239 = vadd.f32 %v230, %v236
      %v240 = vld [vmem:[%s0] sm:$0xff]
      %v241 = vld [vmem:[%s0 + $0x8] sm:$0xff]
      %v242 = vadd.f32 %v238, %v240
      %v243 = vadd.f32 %v239, %v241
      %244 = vst.msk [vmem:[#allocation3] sm:$0xff] %vm55, %v242
      %245 = vst.msk [vmem:[#allocation3 + $0x8] sm:$0xff] %vm55, %v243
    $region29: #{tpu_custom_call.1} parent=1 // pred_fallthru
      _
    // Predicated region
    $region30: #{tpu_custom_call.1} parent=1 // pred_check
      _
    $region31: #{tpu_custom_call.1} parent=1 // pred_check_branch
      %247 = sbr.rel (0) target = $region33
    $region32: #{tpu_custom_call.1} parent=1 // pred_region
      %s249 = ssub.s32 256, 256
      %250 = vsyncadd [#allocation4], %s249
      %s251 = sshll.u32 [#allocation3], 4
      %s252 = int_to_ptr.vmem [resolvable:$true] %s251
      %257 = dma.vmem_to_hbm [thread:$0]  %s252, 256, %s5, [#allocation4], 128, 128, 8
    $region33: #{tpu_custom_call.1} parent=1 // pred_fallthru
      _
    // Predicated region
    $region34: #{tpu_custom_call.1} parent=1 // pred_check
      _
    $region35: #{tpu_custom_call.1} parent=1 // pred_check_branch
      %259 = sbr.rel (0) target = $region37
    $region36: #{tpu_custom_call.1} parent=1 // pred_region
      %260 = dma.done [#allocation4], 256
    $region37: #{tpu_custom_call.1} parent=1 // pred_fallthru
      _
    %261 = vsyncpa [#allocation4], 1

</llo_original>
